<compile_context>
chip_gen: v7x
topology: tpu7x:2x2x1
jax: 0.10.0
libtpu: 0.0.40
codegen_flags: <defaults>
</compile_context>

<pallas_src>
import functools

import jax
import jax.numpy as jnp
from jax.experimental import pallas as pl
from jax.experimental.pallas import tpu as pltpu

INPUT_SIZE = 784
HIDDEN1_SIZE = 16
HIDDEN2_SIZE = 32
OUTPUT_SIZE = 10

# Lane-dense padded sizes (TPU vreg is [8 x 128] lanes).
H1_PAD = 128
H2_PAD = 128
OUT_PAD = 128

_NEG_BIG = -1e30  # bias for padded logit lanes so log_softmax ignores them


def _cdiv(a, b):
    return -(-a // b)


def _round_up(n, m):
    return ((n + m - 1) // m) * m


def _mlp_kernel(x_ref, w1_ref, b1_ref, w2_ref, b2_ref, w3_ref, b3_ref, o_ref):
    # Cast x f32 -> bf16 on the VPU (hidden under the x DMA); MXU accumulates in f32.
    x = x_ref[...].astype(jnp.bfloat16)
    h1 = jnp.dot(x, w1_ref[...], preferred_element_type=jnp.float32)
    h1 = jax.nn.sigmoid(h1 + b1_ref[...])
    # fc2 + sigmoid (tiny f32 matmul; padded w2 rows are zero).
    h2 = jnp.dot(h1, w2_ref[...], preferred_element_type=jnp.float32)
    h2 = jax.nn.sigmoid(h2 + b2_ref[...])
    # fc3 logits; padded output lanes carry a -1e30 bias.
    logits = jnp.dot(h2, w3_ref[...], preferred_element_type=jnp.float32)
    logits = logits + b3_ref[...]
    # Numerically stable log_softmax over the (padded) last dim, in f32.
    m = jnp.max(logits, axis=-1, keepdims=True)
    shifted = logits - m
    lse = jnp.log(jnp.sum(jnp.exp(shifted), axis=-1, keepdims=True))
    # bf16, lane-dense (128-wide) store.
    o_ref[...] = (shifted - lse).astype(o_ref.dtype)


def prepare_params(w1, b1, w2, b2, w3, b3):
    """Pad parameters to lane-dense shapes ONCE (outside the per-batch call path).

    Weights are stored as [in, out] (transposed vs. nn.Linear), biases as [1, out].
    """
    w1_p = jnp.zeros((INPUT_SIZE, H1_PAD), jnp.bfloat16).at[:, :HIDDEN1_SIZE].set(
        w1.astype(jnp.bfloat16))
    b1_p = jnp.zeros((1, H1_PAD), jnp.float32).at[:, :HIDDEN1_SIZE].set(b1)
    w2_p = jnp.zeros((H1_PAD, H2_PAD), jnp.float32).at[
        :HIDDEN1_SIZE, :HIDDEN2_SIZE].set(w2)
    b2_p = jnp.zeros((1, H2_PAD), jnp.float32).at[:, :HIDDEN2_SIZE].set(b2)
    w3_p = jnp.zeros((H2_PAD, OUT_PAD), jnp.float32).at[
        :HIDDEN2_SIZE, :OUTPUT_SIZE].set(w3)
    b3_p = jnp.full((1, OUT_PAD), _NEG_BIG, jnp.float32).at[:, :OUTPUT_SIZE].set(b3)
    return w1_p, b1_p, w2_p, b2_p, w3_p, b3_p


@functools.partial(jax.jit, static_argnames=("block_b",))
def mlp_forward(x, padded_params, *, block_b=2048):
    """Fused forward pass. x: [B, 784] (f32 or bf16); padded_params from prepare_params."""
    w1_p, b1_p, w2_p, b2_p, w3_p, b3_p = padded_params
    B = x.shape[0]
    assert x.shape[1] == INPUT_SIZE

    # Static tile selection.  Multi-block tiles are multiples of 16 (bf16 output
    # sublane quantum; also satisfies the f32 input's multiple-of-8 rule).  Tiny
    # batches get one full block; for B > 32 keep >= 2 grid steps (v7x has 2 TCs).
    if B <= 32:
        block = B
    else:
        block_cap = max(16, (block_b // 16) * 16)
        block = min(block_cap, _round_up(_cdiv(B, 2), 16))
    grid = (_cdiv(B, block),)

    def resident(shape):
        # Constant block index -> stays resident in VMEM across all grid steps.
        return pl.BlockSpec(shape, lambda i: (0, 0))

    out = pl.pallas_call(
        _mlp_kernel,
        out_shape=jax.ShapeDtypeStruct((B, OUT_PAD), jnp.bfloat16),
        grid_spec=pltpu.PrefetchScalarGridSpec(
            num_scalar_prefetch=0,
            grid=grid,
            in_specs=[
                pl.BlockSpec((block, INPUT_SIZE), lambda i: (i, 0)),
                resident((INPUT_SIZE, H1_PAD)),
                resident((1, H1_PAD)),
                resident((H1_PAD, H2_PAD)),
                resident((1, H2_PAD)),
                resident((H2_PAD, OUT_PAD)),
                resident((1, OUT_PAD)),
            ],
            out_specs=pl.BlockSpec((block, OUT_PAD), lambda i: (i, 0)),
        ),
        compiler_params=pltpu.CompilerParams(
            dimension_semantics=("parallel",),
            vmem_limit_bytes=48 * 1024 * 1024,
        ),
    )(x, w1_p, b1_p, w2_p, b2_p, w3_p, b3_p)

    # Strip padded logit lanes (and any ragged rows are never written past B anyway).
    # Output precision is bf16 (fine for argmax / NLL); cast back to f32 in the slice.
    return out[:B, :OUTPUT_SIZE].astype(jnp.float32)


def init_params(key):
    """Deterministic init matching nn.Linear shapes (uniform +-1/sqrt(fan_in))."""
    ks = jax.random.split(key, 6)

    def linear(kw, kb, fan_in, fan_out):
        bound = 1.0 / jnp.sqrt(jnp.float32(fan_in))
        # stored as [in, out] so kernel does x @ W
        w = jax.random.uniform(kw, (fan_in, fan_out), jnp.float32, -bound, bound)
        b = jax.random.uniform(kb, (1, fan_out), jnp.float32, -bound, bound)
        return w, b

    w1, b1 = linear(ks[0], ks[1], INPUT_SIZE, HIDDEN1_SIZE)
    w2, b2 = linear(ks[2], ks[3], HIDDEN1_SIZE, HIDDEN2_SIZE)
    w3, b3 = linear(ks[4], ks[5], HIDDEN2_SIZE, OUTPUT_SIZE)
    return w1, b1, w2, b2, w3, b3


def reference_forward_f32(x, w1, b1, w2, b2, w3, b3):
    """Pure f32 reference matching the original PyTorch module semantics."""
    h1 = jax.nn.sigmoid(x @ w1 + b1)
    h2 = jax.nn.sigmoid(h1 @ w2 + b2)
    logits = h2 @ w3 + b3
    return jax.nn.log_softmax(logits, axis=-1)


def reference_forward_bf16(x, w1, b1, w2, b2, w3, b3):
    """Reference using the same bf16 x/w1 quantization as the kernel (output kept f32)."""
    h1 = jnp.dot(x.astype(jnp.bfloat16), w1.astype(jnp.bfloat16),
                 preferred_element_type=jnp.float32)
    h1 = jax.nn.sigmoid(h1 + b1)
    h2 = jax.nn.sigmoid(h1 @ w2 + b2)
    logits = h2 @ w3 + b3
    return jax.nn.log_softmax(logits, axis=-1)


if __name__ == "__main__":
    key = jax.random.PRNGKey(0)
    k_x, k_p = jax.random.split(key)
    params = init_params(k_p)
    padded = prepare_params(*params)  # hoisted out of the per-call path

    # --- primary small test (single full block) ---
    batch = 8
    x = jax.random.normal(k_x, (batch, INPUT_SIZE), jnp.float32)
    out = jax.block_until_ready(mlp_forward(x, padded))
    assert out.shape == (batch, OUTPUT_SIZE)

    ref_bf16 = reference_forward_bf16(x, *params)
    ref_f32 = reference_forward_f32(x, *params)
    # Kernel output is bf16-rounded -> relaxed tolerances.
    assert jnp.allclose(out, ref_bf16, atol=3e-2, rtol=3e-2)
    assert jnp.allclose(out, ref_f32, atol=1.5e-1, rtol=1.5e-1)
    # log_softmax rows sum to 1 in prob space
    assert jnp.allclose(jnp.sum(jnp.exp(out), axis=-1), 1.0, atol=2e-2)

    # --- ragged multi-block path (B not a multiple of the tile, no jnp.pad) ---
    x_odd = jax.random.normal(k_x, (200, INPUT_SIZE), jnp.float32)
    out_odd = jax.block_until_ready(mlp_forward(x_odd, padded, block_b=128))
    assert out_odd.shape == (200, OUTPUT_SIZE)
    assert jnp.allclose(out_odd, reference_forward_bf16(x_odd, *params),
                        atol=3e-2, rtol=3e-2)
    assert jnp.allclose(jnp.sum(jnp.exp(out_odd), axis=-1), 1.0, atol=2e-2)

    # --- tiny non-aligned batch (single full-dim block) ---
    x_tiny = jax.random.normal(k_x, (13, INPUT_SIZE), jnp.float32)
    out_tiny = jax.block_until_ready(mlp_forward(x_tiny, padded))
    assert out_tiny.shape == (13, OUTPUT_SIZE)
    assert jnp.allclose(out_tiny, reference_forward_bf16(x_tiny, *params),
                        atol=3e-2, rtol=3e-2)

    print("KERNEL_OK")
</pallas_src>

<mosaic_0001>
module attributes {stable_mosaic.version = 11 : i64} {
  func.func @_mlp_kernel(%arg0: i32, %arg1: memref<8x784xf32, #tpu.memory_space<vmem>>, %arg2: memref<784x128xbf16, #tpu.memory_space<vmem>>, %arg3: memref<1x128xf32, #tpu.memory_space<vmem>>, %arg4: memref<128x128xf32, #tpu.memory_space<vmem>>, %arg5: memref<1x128xf32, #tpu.memory_space<vmem>>, %arg6: memref<128x128xf32, #tpu.memory_space<vmem>>, %arg7: memref<1x128xf32, #tpu.memory_space<vmem>>, %arg8: memref<8x128xbf16, #tpu.memory_space<vmem>>) attributes {dimension_semantics = [#tpu.dimension_semantics<parallel>], iteration_bounds = array<i64: 1>, scalar_prefetch = 0 : i64, scratch_operands = 0 : i64, tpu.core_type = #tpu.core_type<tc>, window_params = [{transform_indices = @transform_0, window_bounds = array<i64: 8, 784>}, {pipeline_mode = #tpu.pipeline_mode<synchronous>, transform_indices = @transform_1, window_bounds = array<i64: 784, 128>}, {pipeline_mode = #tpu.pipeline_mode<synchronous>, transform_indices = @transform_2, window_bounds = array<i64: 1, 128>}, {pipeline_mode = #tpu.pipeline_mode<synchronous>, transform_indices = @transform_3, window_bounds = array<i64: 128, 128>}, {pipeline_mode = #tpu.pipeline_mode<synchronous>, transform_indices = @transform_4, window_bounds = array<i64: 1, 128>}, {pipeline_mode = #tpu.pipeline_mode<synchronous>, transform_indices = @transform_5, window_bounds = array<i64: 128, 128>}, {pipeline_mode = #tpu.pipeline_mode<synchronous>, transform_indices = @transform_6, window_bounds = array<i64: 1, 128>}, {transform_indices = @transform_7, window_bounds = array<i64: 8, 128>}]} {
    %c0 = arith.constant 0 : index
    %c0_0 = arith.constant 0 : index
    %0 = vector.load %arg1[%c0, %c0_0] : memref<8x784xf32, #tpu.memory_space<vmem>>, vector<8x784xf32>
    %1 = arith.truncf %0 : vector<8x784xf32> to vector<8x784xbf16>
    %c0_1 = arith.constant 0 : index
    %c0_2 = arith.constant 0 : index
    %2 = vector.load %arg2[%c0_1, %c0_2] : memref<784x128xbf16, #tpu.memory_space<vmem>>, vector<784x128xbf16>
    %cst = arith.constant dense<0.000000e+00> : vector<8x128xf32>
    %3 = tpu.matmul %1, %2, %cst {dimension_numbers = #tpu.dot_dimension_numbers<[1], [0], [0], [1], [0, 0, 1, 1], [], []>} : vector<8x784xbf16>, vector<784x128xbf16>, vector<8x128xf32> -> vector<8x128xf32>
    %c0_3 = arith.constant 0 : index
    %c0_4 = arith.constant 0 : index
    %4 = vector.load %arg3[%c0_3, %c0_4] : memref<1x128xf32, #tpu.memory_space<vmem>>, vector<1x128xf32>
    %5 = vector.broadcast %4 : vector<1x128xf32> to vector<8x128xf32>
    %6 = arith.addf %3, %5 : vector<8x128xf32>
    %7 = arith.negf %6 : vector<8x128xf32>
    %8 = math.exp %7 : vector<8x128xf32>
    %cst_5 = arith.constant 1.000000e+00 : f32
    %9 = vector.broadcast %cst_5 : f32 to vector<8x128xf32>
    %10 = arith.addf %9, %8 : vector<8x128xf32>
    %11 = arith.divf %9, %10 : vector<8x128xf32>
    %c0_6 = arith.constant 0 : index
    %c0_7 = arith.constant 0 : index
    %12 = vector.load %arg4[%c0_6, %c0_7] : memref<128x128xf32, #tpu.memory_space<vmem>>, vector<128x128xf32>
    %cst_8 = arith.constant dense<0.000000e+00> : vector<8x128xf32>
    %13 = tpu.matmul %11, %12, %cst_8 {dimension_numbers = #tpu.dot_dimension_numbers<[1], [0], [0], [1], [0, 0, 1, 1], [], []>} : vector<8x128xf32>, vector<128x128xf32>, vector<8x128xf32> -> vector<8x128xf32>
    %c0_9 = arith.constant 0 : index
    %c0_10 = arith.constant 0 : index
    %14 = vector.load %arg5[%c0_9, %c0_10] : memref<1x128xf32, #tpu.memory_space<vmem>>, vector<1x128xf32>
    %15 = vector.broadcast %14 : vector<1x128xf32> to vector<8x128xf32>
    %16 = arith.addf %13, %15 : vector<8x128xf32>
    %17 = arith.negf %16 : vector<8x128xf32>
    %18 = math.exp %17 : vector<8x128xf32>
    %cst_11 = arith.constant 1.000000e+00 : f32
    %19 = vector.broadcast %cst_11 : f32 to vector<8x128xf32>
    %20 = arith.addf %19, %18 : vector<8x128xf32>
    %21 = arith.divf %19, %20 : vector<8x128xf32>
    %c0_12 = arith.constant 0 : index
    %c0_13 = arith.constant 0 : index
    %22 = vector.load %arg6[%c0_12, %c0_13] : memref<128x128xf32, #tpu.memory_space<vmem>>, vector<128x128xf32>
    %cst_14 = arith.constant dense<0.000000e+00> : vector<8x128xf32>
    %23 = tpu.matmul %21, %22, %cst_14 {dimension_numbers = #tpu.dot_dimension_numbers<[1], [0], [0], [1], [0, 0, 1, 1], [], []>} : vector<8x128xf32>, vector<128x128xf32>, vector<8x128xf32> -> vector<8x128xf32>
    %c0_15 = arith.constant 0 : index
    %c0_16 = arith.constant 0 : index
    %24 = vector.load %arg7[%c0_15, %c0_16] : memref<1x128xf32, #tpu.memory_space<vmem>>, vector<1x128xf32>
    %25 = vector.broadcast %24 : vector<1x128xf32> to vector<8x128xf32>
    %26 = arith.addf %23, %25 : vector<8x128xf32>
    %cst_17 = arith.constant dense<0xFF800000> : vector<8xf32>
    %27 = vector.multi_reduction <maximumf>, %26, %cst_17 [1] : vector<8x128xf32> to vector<8xf32>
    %28 = vector.shape_cast %27 : vector<8xf32> to vector<8x1xf32>
    %29 = vector.broadcast %28 : vector<8x1xf32> to vector<8x128xf32>
    %30 = arith.subf %26, %29 : vector<8x128xf32>
    %31 = math.exp %30 : vector<8x128xf32>
    %cst_18 = arith.constant dense<0.000000e+00> : vector<8xf32>
    %32 = vector.multi_reduction <add>, %31, %cst_18 [1] : vector<8x128xf32> to vector<8xf32>
    %33 = vector.shape_cast %32 : vector<8xf32> to vector<8x1xf32>
    %34 = math.log %33 : vector<8x1xf32>
    %35 = vector.broadcast %34 : vector<8x1xf32> to vector<8x128xf32>
    %36 = arith.subf %30, %35 : vector<8x128xf32>
    %37 = arith.truncf %36 : vector<8x128xf32> to vector<8x128xbf16>
    %c0_19 = arith.constant 0 : index
    %c0_20 = arith.constant 0 : index
    %38 = vector.load %arg8[%c0_19, %c0_20] : memref<8x128xbf16, #tpu.memory_space<vmem>>, vector<8x128xbf16>
    tpu.vector_store %arg8[%c0_19, %c0_20], %37 {strides = array<i32>} : memref<8x128xbf16, #tpu.memory_space<vmem>>, vector<8x128xbf16>,
    return
  }
  func.func @transform_0(%arg0: i32) -> (i32, i32) {
    %c0_i32 = arith.constant 0 : i32
    %c0_i32_0 = arith.constant 0 : i32
    return %arg0, %c0_i32 : i32, i32
  }
  func.func @transform_1(%arg0: i32) -> (i32, i32) {
    %c0_i32 = arith.constant 0 : i32
    %c0_i32_0 = arith.constant 0 : i32
    %c0_i32_1 = arith.constant 0 : i32
    return %c0_i32, %c0_i32_0 : i32, i32
  }
  func.func @transform_2(%arg0: i32) -> (i32, i32) {
    %c0_i32 = arith.constant 0 : i32
    %c0_i32_0 = arith.constant 0 : i32
    %c0_i32_1 = arith.constant 0 : i32
    return %c0_i32, %c0_i32_0 : i32, i32
  }
  func.func @transform_3(%arg0: i32) -> (i32, i32) {
    %c0_i32 = arith.constant 0 : i32
    %c0_i32_0 = arith.constant 0 : i32
    %c0_i32_1 = arith.constant 0 : i32
    return %c0_i32, %c0_i32_0 : i32, i32
  }
  func.func @transform_4(%arg0: i32) -> (i32, i32) {
    %c0_i32 = arith.constant 0 : i32
    %c0_i32_0 = arith.constant 0 : i32
    %c0_i32_1 = arith.constant 0 : i32
    return %c0_i32, %c0_i32_0 : i32, i32
  }
  func.func @transform_5(%arg0: i32) -> (i32, i32) {
    %c0_i32 = arith.constant 0 : i32
    %c0_i32_0 = arith.constant 0 : i32
    %c0_i32_1 = arith.constant 0 : i32
    return %c0_i32, %c0_i32_0 : i32, i32
  }
  func.func @transform_6(%arg0: i32) -> (i32, i32) {
    %c0_i32 = arith.constant 0 : i32
    %c0_i32_0 = arith.constant 0 : i32
    %c0_i32_1 = arith.constant 0 : i32
    return %c0_i32, %c0_i32_0 : i32, i32
  }
  func.func @transform_7(%arg0: i32) -> (i32, i32) {
    %c0_i32 = arith.constant 0 : i32
    %c0_i32_0 = arith.constant 0 : i32
    return %arg0, %c0_i32 : i32, i32
  }
}

</mosaic_0001>

<llo_original>
// kernel: mlp_forward.1
$region0: #{mlp_forward.1}
  #allocation0 [shape = 'u32[]', space=smem, size = 0x4, offset = 0x4, fixed_abs, tag = 'smem constant byte address 0x4 - core index']
  #allocation1 [shape = 'u32[144,128]{1,0:T(1,128)}', space=vmem, size = 0x12000, scoped, tag = 'internal scratch']
  %s0 = inlined_call_operand.hbm [shape: f32[8,784], index: 0, kind: input, shape index: {}]
  %s1 = inlined_call_operand.hbm [shape: bf16[784,128], index: 1, kind: input, shape index: {}]
  %s2 = inlined_call_operand.vmem [shape: f32[1,128], index: 2, kind: input, shape index: {}]
  %s3 = inlined_call_operand.hbm [shape: f32[128,128], index: 3, kind: input, shape index: {}]
  %s4 = inlined_call_operand.vmem [shape: f32[1,128], index: 4, kind: input, shape index: {}]
  %s5 = inlined_call_operand.hbm [shape: f32[128,128], index: 5, kind: input, shape index: {}]
  %s6 = inlined_call_operand.vmem [shape: f32[1,128], index: 6, kind: input, shape index: {}]
  %s7 = inlined_call_operand.vmem [shape: bf16[8,128], index: 7, kind: output, shape index: {}]
  %s8 = sld [smem:[#allocation0]]
  $region54: #{mlp_forward.1} parent=0
    _
  %s10 = ssub.s32 1, %s8
  %s11 = scalar_select 0, %s10, %s8
  $region1: #{mlp_forward.1} parent=0
    #allocation2 [shape = 'u8[28672]{0}', space=vmem, size = 0x7000, scoped, tag = 'input window, operand 0, single buffered']
    #allocation3 [shape = 's32[1]{0}', space=sflag, size = 0x4, scoped, tag = 'scoped memory for mlp_forward.1']
    #allocation4 [shape = 'u8[200704]{0}', space=vmem, size = 0x31000, scoped, tag = 'input window, operand 1, single buffered']
    #allocation5 [shape = 's32[1]{0}', space=sflag, size = 0x4, scoped, tag = 'scoped memory for mlp_forward.1']
    #allocation6 [shape = 'u8[65536]{0}', space=vmem, size = 0x10000, scoped, tag = 'input window, operand 3, single buffered']
    #allocation7 [shape = 'u8[65536]{0}', space=vmem, size = 0x10000, scoped, tag = 'input window, operand 5, single buffered']
    #allocation8 [shape = 's32[1]{0}', space=sflag, size = 0x4, scoped, tag = 'scoped memory for mlp_forward.1']
    %12 = vsyncpa [#allocation3], 0
    %13 = vsyncpa [#allocation5], 0
    %14 = vsyncpa [#allocation8], 0
    // Predicated region
    $region2: #{mlp_forward.1} parent=1 // pred_check
      _
    $region3: #{mlp_forward.1} parent=1 // pred_check_branch
      %16 = sbr.rel (0) target = $region5
    $region4: #{mlp_forward.1} parent=1 // pred_region
      %s18 = ssub.s32 896, 896
      %19 = vsyncadd [#allocation3], %s18
      %s21 = sshll.u32 [#allocation2], 4
      %s22 = int_to_ptr.vmem [resolvable:$true] %s21
      %24 = dma.hbm_to_vmem [thread:$0]  %s0, 896, %s22, [#allocation3]
    $region5: #{mlp_forward.1} parent=1 // pred_fallthru
      _
    // Predicated region
    $region6: #{mlp_forward.1} parent=1 // pred_check
      _
    $region7: #{mlp_forward.1} parent=1 // pred_check_branch
      %26 = sbr.rel (0) target = $region9
    $region8: #{mlp_forward.1} parent=1 // pred_region
      %s28 = ssub.s32 6272, 6272
      %29 = vsyncadd [#allocation5], %s28
      %s30 = sshll.u32 [#allocation4], 4
      %s31 = int_to_ptr.vmem [resolvable:$true] %s30
      %36 = dma.hbm_to_vmem [thread:$0]  %s1, 6272, %s31, [#allocation5], 64, 64, 4
    $region9: #{mlp_forward.1} parent=1 // pred_fallthru
      _
    // Predicated region
    $region10: #{mlp_forward.1} parent=1 // pred_check
      _
    $region11: #{mlp_forward.1} parent=1 // pred_check_branch
      %38 = sbr.rel (0) target = $region13
    $region12: #{mlp_forward.1} parent=1 // pred_region
      _
    $region13: #{mlp_forward.1} parent=1 // pred_fallthru
      _
    // Predicated region
    $region14: #{mlp_forward.1} parent=1 // pred_check
      _
    $region15: #{mlp_forward.1} parent=1 // pred_check_branch
      %40 = sbr.rel (0) target = $region17
    $region16: #{mlp_forward.1} parent=1 // pred_region
      %s42 = ssub.s32 2048, 2048
      %43 = vsyncadd [#allocation5], %s42
      %s44 = sshll.u32 [#allocation6], 4
      %s45 = int_to_ptr.vmem [resolvable:$true] %s44
      %50 = dma.hbm_to_vmem [thread:$0]  %s3, 2048, %s45, [#allocation5], 128, 128, 8
    $region17: #{mlp_forward.1} parent=1 // pred_fallthru
      _
    // Predicated region
    $region18: #{mlp_forward.1} parent=1 // pred_check
      _
    $region19: #{mlp_forward.1} parent=1 // pred_check_branch
      %52 = sbr.rel (0) target = $region21
    $region20: #{mlp_forward.1} parent=1 // pred_region
      _
    $region21: #{mlp_forward.1} parent=1 // pred_fallthru
      _
    // Predicated region
    $region22: #{mlp_forward.1} parent=1 // pred_check
      _
    $region23: #{mlp_forward.1} parent=1 // pred_check_branch
      %54 = sbr.rel (0) target = $region25
    $region24: #{mlp_forward.1} parent=1 // pred_region
      %s56 = ssub.s32 2048, 2048
      %57 = vsyncadd [#allocation8], %s56
      %s58 = sshll.u32 [#allocation7], 4
      %s59 = int_to_ptr.vmem [resolvable:$true] %s58
      %64 = dma.hbm_to_vmem [thread:$0]  %s5, 2048, %s59, [#allocation8], 128, 128, 8
    $region25: #{mlp_forward.1} parent=1 // pred_fallthru
      _
    // Predicated region
    $region26: #{mlp_forward.1} parent=1 // pred_check
      _
    $region27: #{mlp_forward.1} parent=1 // pred_check_branch
      %66 = sbr.rel (0) target = $region29
    $region28: #{mlp_forward.1} parent=1 // pred_region
      _
    $region29: #{mlp_forward.1} parent=1 // pred_fallthru
      _
    // Predicated region
    $region30: #{mlp_forward.1} parent=1 // pred_check
      _
    $region31: #{mlp_forward.1} parent=1 // pred_check_branch
      %68 = sbr.rel (0) target = $region33
    $region32: #{mlp_forward.1} parent=1 // pred_region
      %69 = dma.done [#allocation3], 896
    $region33: #{mlp_forward.1} parent=1 // pred_fallthru
      _
    // Predicated region
    $region34: #{mlp_forward.1} parent=1 // pred_check
      _
    $region35: #{mlp_forward.1} parent=1 // pred_check_branch
      %71 = sbr.rel (0) target = $region37
    $region36: #{mlp_forward.1} parent=1 // pred_region
      %72 = dma.done [#allocation5], 6272
    $region37: #{mlp_forward.1} parent=1 // pred_fallthru
      _
    // Predicated region
    $region38: #{mlp_forward.1} parent=1 // pred_check
      _
    $region39: #{mlp_forward.1} parent=1 // pred_check_branch
      %74 = sbr.rel (0) target = $region41
    $region40: #{mlp_forward.1} parent=1 // pred_region
      %75 = dma.done [#allocation5], 2048
    $region41: #{mlp_forward.1} parent=1 // pred_fallthru
      _
    // Predicated region
    $region42: #{mlp_forward.1} parent=1 // pred_check
      _
    $region43: #{mlp_forward.1} parent=1 // pred_check_branch
      %77 = sbr.rel (0) target = $region45
    $region44: #{mlp_forward.1} parent=1 // pred_region
      %78 = dma.done [#allocation8], 2048
    $region45: #{mlp_forward.1} parent=1 // pred_fallthru
      _
    %v80 = vld [vmem:[#allocation2] sm:$0xff]
    %v81 = vld [vmem:[#allocation2 + $0x8] sm:$0xff]
    %v82 = vld [vmem:[#allocation2 + $0x10] sm:$0xff]
    %v83 = vld [vmem:[#allocation2 + $0x18] sm:$0xff]
    %v84 = vld [vmem:[#allocation2 + $0x20] sm:$0xff]
    %v85 = vld [vmem:[#allocation2 + $0x28] sm:$0xff]
    %v86 = vld [vmem:[#allocation2 + $0x30] sm:$0xff]
    %v87 = vpack.c.bf16 %v80, %v80
    %v88 = vpack.c.bf16 %v81, %v81
    %v89 = vpack.c.bf16 %v82, %v82
    %v90 = vpack.c.bf16 %v83, %v83
    %v91 = vpack.c.bf16 %v84, %v84
    %v92 = vpack.c.bf16 %v85, %v85
    %v93 = vpack.c.bf16 %v86, %v86
    %v94 = vld [vmem:[#allocation4] sm:$0xf]
    %v95 = vld [vmem:[#allocation4 + $0x4] sm:$0xf]
    %v96 = vld [vmem:[#allocation4 + $0x8] sm:$0xf]
    %v97 = vld [vmem:[#allocation4 + $0xc] sm:$0xf]
    %v98 = vld [vmem:[#allocation4 + $0x10] sm:$0xf]
    %v99 = vld [vmem:[#allocation4 + $0x14] sm:$0xf]
    %v100 = vld [vmem:[#allocation4 + $0x18] sm:$0xf]
    %v101 = vld [vmem:[#allocation4 + $0x1c] sm:$0xf]
    %v102 = vld [vmem:[#allocation4 + $0x20] sm:$0xf]
    %v103 = vld [vmem:[#allocation4 + $0x24] sm:$0xf]
    %v104 = vld [vmem:[#allocation4 + $0x28] sm:$0xf]
    %v105 = vld [vmem:[#allocation4 + $0x2c] sm:$0xf]
    %v106 = vld [vmem:[#allocation4 + $0x30] sm:$0xf]
    %v107 = vld [vmem:[#allocation4 + $0x34] sm:$0xf]
    %v108 = vld [vmem:[#allocation4 + $0x38] sm:$0xf]
    %v109 = vld [vmem:[#allocation4 + $0x3c] sm:$0xf]
    %v110 = vld [vmem:[#allocation4 + $0x40] sm:$0xf]
    %v111 = vld [vmem:[#allocation4 + $0x44] sm:$0xf]
    %v112 = vld [vmem:[#allocation4 + $0x48] sm:$0xf]
    %v113 = vld [vmem:[#allocation4 + $0x4c] sm:$0xf]
    %v114 = vld [vmem:[#allocation4 + $0x50] sm:$0xf]
    %v115 = vld [vmem:[#allocation4 + $0x54] sm:$0xf]
    %v116 = vld [vmem:[#allocation4 + $0x58] sm:$0xf]
    %v117 = vld [vmem:[#allocation4 + $0x5c] sm:$0xf]
    %v118 = vld [vmem:[#allocation4 + $0x60] sm:$0xf]
    %v119 = vld [vmem:[#allocation4 + $0x64] sm:$0xf]
    %v120 = vld [vmem:[#allocation4 + $0x68] sm:$0xf]
    %v121 = vld [vmem:[#allocation4 + $0x6c] sm:$0xf]
    %v122 = vld [vmem:[#allocation4 + $0x70] sm:$0xf]
    %v123 = vld [vmem:[#allocation4 + $0x74] sm:$0xf]
    %v124 = vld [vmem:[#allocation4 + $0x78] sm:$0xf]
    %v125 = vld [vmem:[#allocation4 + $0x7c] sm:$0xf]
    %v126 = vld [vmem:[#allocation4 + $0x80] sm:$0xf]
    %v127 = vld [vmem:[#allocation4 + $0x84] sm:$0xf]
    %v128 = vld [vmem:[#allocation4 + $0x88] sm:$0xf]
    %v129 = vld [vmem:[#allocation4 + $0x8c] sm:$0xf]
    %v130 = vld [vmem:[#allocation4 + $0x90] sm:$0xf]
    %v131 = vld [vmem:[#allocation4 + $0x94] sm:$0xf]
    %v132 = vld [vmem:[#allocation4 + $0x98] sm:$0xf]
    %v133 = vld [vmem:[#allocation4 + $0x9c] sm:$0xf]
    %v134 = vld [vmem:[#allocation4 + $0xa0] sm:$0xf]
    %v135 = vld [vmem:[#allocation4 + $0xa4] sm:$0xf]
    %v136 = vld [vmem:[#allocation4 + $0xa8] sm:$0xf]
    %v137 = vld [vmem:[#allocation4 + $0xac] sm:$0xf]
    %v138 = vld [vmem:[#allocation4 + $0xb0] sm:$0xf]
    %v139 = vld [vmem:[#allocation4 + $0xb4] sm:$0xf]
    %v140 = vld [vmem:[#allocation4 + $0xb8] sm:$0xf]
    %v141 = vld [vmem:[#allocation4 + $0xbc] sm:$0xf]
    %v142 = vld [vmem:[#allocation4 + $0xc0] sm:$0xf]
    %v143 = vld [vmem:[#allocation4 + $0xc4] sm:$0xf]
    %v144 = vld [vmem:[#allocation4 + $0xc8] sm:$0xf]
    %v145 = vld [vmem:[#allocation4 + $0xcc] sm:$0xf]
    %v146 = vld [vmem:[#allocation4 + $0xd0] sm:$0xf]
    %v147 = vld [vmem:[#allocation4 + $0xd4] sm:$0xf]
    %v148 = vld [vmem:[#allocation4 + $0xd8] sm:$0xf]
    %v149 = vld [vmem:[#allocation4 + $0xdc] sm:$0xf]
    %v150 = vld [vmem:[#allocation4 + $0xe0] sm:$0xf]
    %v151 = vld [vmem:[#allocation4 + $0xe4] sm:$0xf]
    %v152 = vld [vmem:[#allocation4 + $0xe8] sm:$0xf]
    %v153 = vld [vmem:[#allocation4 + $0xec] sm:$0xf]
    %v154 = vld [vmem:[#allocation4 + $0xf0] sm:$0xf]
    %v155 = vld [vmem:[#allocation4 + $0xf4] sm:$0xf]
    %v156 = vld [vmem:[#allocation4 + $0xf8] sm:$0xf]
    %v157 = vld [vmem:[#allocation4 + $0xfc] sm:$0xf]
    %v158 = vld [vmem:[#allocation4 + $0x100] sm:$0xf]
    %v159 = vld [vmem:[#allocation4 + $0x104] sm:$0xf]
    %v160 = vld [vmem:[#allocation4 + $0x108] sm:$0xf]
    %v161 = vld [vmem:[#allocation4 + $0x10c] sm:$0xf]
    %v162 = vld [vmem:[#allocation4 + $0x110] sm:$0xf]
    %v163 = vld [vmem:[#allocation4 + $0x114] sm:$0xf]
    %v164 = vld [vmem:[#allocation4 + $0x118] sm:$0xf]
    %v165 = vld [vmem:[#allocation4 + $0x11c] sm:$0xf]
    %v166 = vld [vmem:[#allocation4 + $0x120] sm:$0xf]
    %v167 = vld [vmem:[#allocation4 + $0x124] sm:$0xf]
    %v168 = vld [vmem:[#allocation4 + $0x128] sm:$0xf]
    %v169 = vld [vmem:[#allocation4 + $0x12c] sm:$0xf]
    %v170 = vld [vmem:[#allocation4 + $0x130] sm:$0xf]
    %v171 = vld [vmem:[#allocation4 + $0x134] sm:$0xf]
    %v172 = vld [vmem:[#allocation4 + $0x138] sm:$0xf]
    %v173 = vld [vmem:[#allocation4 + $0x13c] sm:$0xf]
    %v174 = vld [vmem:[#allocation4 + $0x140] sm:$0xf]
    %v175 = vld [vmem:[#allocation4 + $0x144] sm:$0xf]
    %v176 = vld [vmem:[#allocation4 + $0x148] sm:$0xf]
    %v177 = vld [vmem:[#allocation4 + $0x14c] sm:$0xf]
    %v178 = vld [vmem:[#allocation4 + $0x150] sm:$0xf]
    %v179 = vld [vmem:[#allocation4 + $0x154] sm:$0xf]
    %v180 = vld [vmem:[#allocation4 + $0x158] sm:$0xf]
    %v181 = vld [vmem:[#allocation4 + $0x15c] sm:$0xf]
    %v182 = vld [vmem:[#allocation4 + $0x160] sm:$0xf]
    %v183 = vld [vmem:[#allocation4 + $0x164] sm:$0xf]
    %v184 = vld [vmem:[#allocation4 + $0x168] sm:$0xf]
    %v185 = vld [vmem:[#allocation4 + $0x16c] sm:$0xf]
    %v186 = vld [vmem:[#allocation4 + $0x170] sm:$0xf]
    %v187 = vld [vmem:[#allocation4 + $0x174] sm:$0xf]
    %v188 = vld [vmem:[#allocation4 + $0x178] sm:$0xf]
    %v189 = vld [vmem:[#allocation4 + $0x17c] sm:$0xf]
    %v190 = vld [vmem:[#allocation4 + $0x180] sm:$0xf]
    %v191 = vld [vmem:[#allocation4 + $0x184] sm:$0xf]
    %v192 = vld [vmem:[%s2] sm:$0x1]
    %v194 = vlaneseq
    %v195 = vshrl.u32 %v194, 7
    %v196 = vsub.s32 0, %v195
    %v197 = vrot.slane %v192, %v196
    %v297 = vunpack.c.l.b16 %v94
    %v298 = vunpack.c.l.b16 %v95
    %v299 = vunpack.c.l.b16 %v96
    %v300 = vunpack.c.l.b16 %v97
    %v301 = vunpack.c.l.b16 %v98
    %v302 = vunpack.c.l.b16 %v99
    %v303 = vunpack.c.l.b16 %v100
    %v304 = vunpack.c.l.b16 %v101
    %v305 = vunpack.c.l.b16 %v102
    %v306 = vunpack.c.l.b16 %v103
    %v307 = vunpack.c.l.b16 %v104
    %v308 = vunpack.c.l.b16 %v105
    %v309 = vunpack.c.l.b16 %v106
    %v310 = vunpack.c.l.b16 %v107
    %v311 = vunpack.c.l.b16 %v108
    %v312 = vunpack.c.l.b16 %v109
    %v313 = vunpack.c.l.b16 %v110
    %v314 = vunpack.c.l.b16 %v111
    %v315 = vunpack.c.l.b16 %v112
    %v316 = vunpack.c.l.b16 %v113
    %v317 = vunpack.c.l.b16 %v114
    %v318 = vunpack.c.l.b16 %v115
    %v319 = vunpack.c.l.b16 %v116
    %v320 = vunpack.c.l.b16 %v117
    %v321 = vunpack.c.l.b16 %v118
    %v322 = vunpack.c.l.b16 %v119
    %v323 = vunpack.c.l.b16 %v120
    %v324 = vunpack.c.l.b16 %v121
    %v325 = vunpack.c.l.b16 %v122
    %v326 = vunpack.c.l.b16 %v123
    %v327 = vunpack.c.l.b16 %v124
    %v328 = vunpack.c.l.b16 %v125
    %v329 = vunpack.c.l.b16 %v126
    %v330 = vunpack.c.l.b16 %v127
    %v331 = vunpack.c.l.b16 %v128
    %v332 = vunpack.c.l.b16 %v129
    %v333 = vunpack.c.l.b16 %v130
    %v334 = vunpack.c.l.b16 %v131
    %v335 = vunpack.c.l.b16 %v132
    %v336 = vunpack.c.l.b16 %v133
    %v337 = vunpack.c.l.b16 %v134
    %v338 = vunpack.c.l.b16 %v135
    %v339 = vunpack.c.l.b16 %v136
    %v340 = vunpack.c.l.b16 %v137
    %v341 = vunpack.c.l.b16 %v138
    %v342 = vunpack.c.l.b16 %v139
    %v343 = vunpack.c.l.b16 %v140
    %v344 = vunpack.c.l.b16 %v141
    %v345 = vunpack.c.l.b16 %v142
    %v346 = vunpack.c.l.b16 %v143
    %v347 = vunpack.c.l.b16 %v144
    %v348 = vunpack.c.l.b16 %v145
    %v349 = vunpack.c.l.b16 %v146
    %v350 = vunpack.c.l.b16 %v147
    %v351 = vunpack.c.l.b16 %v148
    %v352 = vunpack.c.l.b16 %v149
    %v353 = vunpack.c.l.b16 %v150
    %v354 = vunpack.c.l.b16 %v151
    %v355 = vunpack.c.l.b16 %v152
    %v356 = vunpack.c.l.b16 %v153
    %v357 = vunpack.c.l.b16 %v154
    %v358 = vunpack.c.l.b16 %v155
    %v359 = vunpack.c.l.b16 %v156
    %v360 = vunpack.c.l.b16 %v157
    %v361 = vunpack.c.l.b16 %v158
    %v362 = vunpack.c.l.b16 %v159
    %v363 = vunpack.c.l.b16 %v160
    %v364 = vunpack.c.l.b16 %v161
    %v365 = vunpack.c.l.b16 %v162
    %v366 = vunpack.c.l.b16 %v163
    %v367 = vunpack.c.l.b16 %v164
    %v368 = vunpack.c.l.b16 %v165
    %v369 = vunpack.c.l.b16 %v166
    %v370 = vunpack.c.l.b16 %v167
    %v371 = vunpack.c.l.b16 %v168
    %v372 = vunpack.c.l.b16 %v169
    %v373 = vunpack.c.l.b16 %v170
    %v374 = vunpack.c.l.b16 %v171
    %v375 = vunpack.c.l.b16 %v172
    %v376 = vunpack.c.l.b16 %v173
    %v377 = vunpack.c.l.b16 %v174
    %v378 = vunpack.c.l.b16 %v175
    %v379 = vunpack.c.l.b16 %v176
    %v380 = vunpack.c.l.b16 %v177
    %v381 = vunpack.c.l.b16 %v178
    %v382 = vunpack.c.l.b16 %v179
    %v383 = vunpack.c.l.b16 %v180
    %v384 = vunpack.c.l.b16 %v181
    %v385 = vunpack.c.l.b16 %v182
    %v386 = vunpack.c.l.b16 %v183
    %v387 = vunpack.c.l.b16 %v184
    %v388 = vunpack.c.l.b16 %v185
    %v389 = vunpack.c.l.b16 %v186
    %v390 = vunpack.c.l.b16 %v187
    %v391 = vunpack.c.l.b16 %v188
    %v392 = vunpack.c.l.b16 %v189
    %v393 = vunpack.c.l.b16 %v190
    %v394 = vunpack.c.l.b16 %v191
    %v395 = vpack.c.b16 %v298, %v297
    %v396 = vpack.c.b16 %v300, %v299
    %v397 = vpack.c.b16 %v302, %v301
    %v398 = vpack.c.b16 %v304, %v303
    %v399 = vpack.c.b16 %v306, %v305
    %v400 = vpack.c.b16 %v308, %v307
    %v401 = vpack.c.b16 %v310, %v309
    %v402 = vpack.c.b16 %v312, %v311
    %v403 = vpack.c.b16 %v314, %v313
    %v404 = vpack.c.b16 %v316, %v315
    %v405 = vpack.c.b16 %v318, %v317
    %v406 = vpack.c.b16 %v320, %v319
    %v407 = vpack.c.b16 %v322, %v321
    %v408 = vpack.c.b16 %v324, %v323
    %v409 = vpack.c.b16 %v326, %v325
    %v410 = vpack.c.b16 %v328, %v327
    %v411 = vpack.c.b16 %v330, %v329
    %v412 = vpack.c.b16 %v332, %v331
    %v413 = vpack.c.b16 %v334, %v333
    %v414 = vpack.c.b16 %v336, %v335
    %v415 = vpack.c.b16 %v338, %v337
    %v416 = vpack.c.b16 %v340, %v339
    %v417 = vpack.c.b16 %v342, %v341
    %v418 = vpack.c.b16 %v344, %v343
    %v419 = vpack.c.b16 %v346, %v345
    %v420 = vpack.c.b16 %v348, %v347
    %v421 = vpack.c.b16 %v350, %v349
    %v422 = vpack.c.b16 %v352, %v351
    %v423 = vpack.c.b16 %v354, %v353
    %v424 = vpack.c.b16 %v356, %v355
    %v425 = vpack.c.b16 %v358, %v357
    %v426 = vpack.c.b16 %v360, %v359
    %v427 = vpack.c.b16 %v362, %v361
    %v428 = vpack.c.b16 %v364, %v363
    %v429 = vpack.c.b16 %v366, %v365
    %v430 = vpack.c.b16 %v368, %v367
    %v431 = vpack.c.b16 %v370, %v369
    %v432 = vpack.c.b16 %v372, %v371
    %v433 = vpack.c.b16 %v374, %v373
    %v434 = vpack.c.b16 %v376, %v375
    %v435 = vpack.c.b16 %v378, %v377
    %v436 = vpack.c.b16 %v380, %v379
    %v437 = vpack.c.b16 %v382, %v381
    %v438 = vpack.c.b16 %v384, %v383
    %v439 = vpack.c.b16 %v386, %v385
    %v440 = vpack.c.b16 %v388, %v387
    %v441 = vpack.c.b16 %v390, %v389
    %v442 = vpack.c.b16 %v392, %v391
    %v443 = vpack.c.b16 %v394, %v393
    %vm493 = vcmask 130048
    %v495 = vsel %vm493, %v93, 0
    %497 = vmatprep.subr.bf16.mxu0 0
    %498 = vmatpush1.bf16.msra.mxu0 %v395
    %499 = vmatprep.subr.bf16.mxu0 0
    %500 = vmatpush1.bf16.msra.mxu0 %v396
    %501 = vmatprep.subr.bf16.mxu0 0
    %502 = vmatpush1.bf16.msra.mxu0 %v397
    %503 = vmatprep.subr.bf16.mxu0 0
    %504 = vmatpush1.bf16.msra.mxu0 %v398
    %505 = vmatprep.subr.bf16.mxu0 0
    %506 = vmatpush1.bf16.msra.mxu0 %v399
    %507 = vmatprep.subr.bf16.mxu0 0
    %508 = vmatpush1.bf16.msra.mxu0 %v400
    %509 = vmatprep.subr.bf16.mxu0 0
    %510 = vmatpush1.bf16.msra.mxu0 %v401
    %511 = vmatprep.subr.bf16.mxu0 0
    %512 = vmatpush1.bf16.msra.mxu0 %v402
    %513 = vmatprep.subr.bf16.mxu0 0
    %514 = vmatpush1.bf16.msra.mxu0 %v403
    %515 = vmatprep.subr.bf16.mxu0 0
    %516 = vmatpush1.bf16.msra.mxu0 %v404
    %517 = vmatprep.subr.bf16.mxu0 0
    %518 = vmatpush1.bf16.msra.mxu0 %v405
    %519 = vmatprep.subr.bf16.mxu0 0
    %520 = vmatpush1.bf16.msra.mxu0 %v406
    %521 = vmatprep.subr.bf16.mxu0 0
    %522 = vmatpush1.bf16.msra.mxu0 %v407
    %523 = vmatprep.subr.bf16.mxu0 0
    %524 = vmatpush1.bf16.msra.mxu0 %v408
    %525 = vmatprep.subr.bf16.mxu0 0
    %526 = vmatpush1.bf16.msra.mxu0 %v409
    %527 = vmatprep.subr.bf16.mxu0 0
    %528 = vmatpush1.bf16.msra.mxu0 %v410
    %529 = vmatprep.mubr.bf16.mxu0 %v88
    %530 = vmatmul.mubr.bf16.gmra.mrb[0].mxu0 %v87
    %v531 = vpop.f32.mrb[0].mxu0
    %v532 = vadd.f32 %v197, %v531
    %v533 = vpop.f32.mrb[0].mxu0
    %v534 = vpop.f32.mrb[0].mxu0
    %v535 = vpop.f32.mrb[0].mxu0
    %536 = vdwg.mxu0
    %537 = vmatprep.subr.bf16.mxu0 0
    %538 = vmatpush1.bf16.msra.mxu0 %v411
    %539 = vmatprep.subr.bf16.mxu0 0
    %540 = vmatpush1.bf16.msra.mxu0 %v412
    %541 = vmatprep.subr.bf16.mxu0 0
    %542 = vmatpush1.bf16.msra.mxu0 %v413
    %543 = vmatprep.subr.bf16.mxu0 0
    %544 = vmatpush1.bf16.msra.mxu0 %v414
    %545 = vmatprep.subr.bf16.mxu0 0
    %546 = vmatpush1.bf16.msra.mxu0 %v415
    %547 = vmatprep.subr.bf16.mxu0 0
    %548 = vmatpush1.bf16.msra.mxu0 %v416
    %549 = vmatprep.subr.bf16.mxu0 0
    %550 = vmatpush1.bf16.msra.mxu0 %v417
    %551 = vmatprep.subr.bf16.mxu0 0
    %552 = vmatpush1.bf16.msra.mxu0 %v418
    %553 = vmatprep.subr.bf16.mxu0 0
    %554 = vmatpush1.bf16.msra.mxu0 %v419
    %555 = vmatprep.subr.bf16.mxu0 0
    %556 = vmatpush1.bf16.msra.mxu0 %v420
    %557 = vmatprep.subr.bf16.mxu0 0
    %558 = vmatpush1.bf16.msra.mxu0 %v421
    %559 = vmatprep.subr.bf16.mxu0 0
    %560 = vmatpush1.bf16.msra.mxu0 %v422
    %561 = vmatprep.subr.bf16.mxu0 0
    %562 = vmatpush1.bf16.msra.mxu0 %v423
    %563 = vmatprep.subr.bf16.mxu0 0
    %564 = vmatpush1.bf16.msra.mxu0 %v424
    %565 = vmatprep.subr.bf16.mxu0 0
    %566 = vmatpush1.bf16.msra.mxu0 %v425
    %567 = vmatprep.subr.bf16.mxu0 0
    %568 = vmatpush1.bf16.msra.mxu0 %v426
    %569 = vmatprep.mubr.bf16.mxu0 %v90
    %570 = vmatmul.mubr.bf16.gmra.mrb[0].mxu0 %v89
    %v571 = vpop.f32.mrb[0].mxu0
    %v572 = vadd.f32 %v532, %v571
    %v573 = vpop.f32.mrb[0].mxu0
    %v574 = vpop.f32.mrb[0].mxu0
    %v575 = vpop.f32.mrb[0].mxu0
    %576 = vdwg.mxu0
    %577 = vmatprep.subr.bf16.mxu0 0
    %578 = vmatpush1.bf16.msra.mxu0 %v427
    %579 = vmatprep.subr.bf16.mxu0 0
    %580 = vmatpush1.bf16.msra.mxu0 %v428
    %581 = vmatprep.subr.bf16.mxu0 0
    %582 = vmatpush1.bf16.msra.mxu0 %v429
    %583 = vmatprep.subr.bf16.mxu0 0
    %584 = vmatpush1.bf16.msra.mxu0 %v430
    %585 = vmatprep.subr.bf16.mxu0 0
    %586 = vmatpush1.bf16.msra.mxu0 %v431
    %587 = vmatprep.subr.bf16.mxu0 0
    %588 = vmatpush1.bf16.msra.mxu0 %v432
    %589 = vmatprep.subr.bf16.mxu0 0
    %590 = vmatpush1.bf16.msra.mxu0 %v433
    %591 = vmatprep.subr.bf16.mxu0 0
    %592 = vmatpush1.bf16.msra.mxu0 %v434
    %593 = vmatprep.subr.bf16.mxu0 0
    %594 = vmatpush1.bf16.msra.mxu0 %v435
    %595 = vmatprep.subr.bf16.mxu0 0
    %596 = vmatpush1.bf16.msra.mxu0 %v436
    %597 = vmatprep.subr.bf16.mxu0 0
    %598 = vmatpush1.bf16.msra.mxu0 %v437
    %599 = vmatprep.subr.bf16.mxu0 0
    %600 = vmatpush1.bf16.msra.mxu0 %v438
    %601 = vmatprep.subr.bf16.mxu0 0
    %602 = vmatpush1.bf16.msra.mxu0 %v439
    %603 = vmatprep.subr.bf16.mxu0 0
    %604 = vmatpush1.bf16.msra.mxu0 %v440
    %605 = vmatprep.subr.bf16.mxu0 0
    %606 = vmatpush1.bf16.msra.mxu0 %v441
    %607 = vmatprep.subr.bf16.mxu0 0
    %608 = vmatpush1.bf16.msra.mxu0 %v442
    %609 = vmatprep.mubr.bf16.mxu0 %v92
    %610 = vmatmul.mubr.bf16.gmra.mrb[0].mxu0 %v91
    %v611 = vpop.f32.mrb[0].mxu0
    %v612 = vadd.f32 %v572, %v611
    %v613 = vpop.f32.mrb[0].mxu0
    %v614 = vpop.f32.mrb[0].mxu0
    %v615 = vpop.f32.mrb[0].mxu0
    %616 = vdwg.mxu0
    %617 = vmatprep.subr.bf16.mxu0 0
    %618 = vmatpush1.bf16.msra.mxu0 %v443
    %619 = vmatprep.subr.bf16.mxu0 0
    %620 = vmatpush1.bf16.msra.mxu0 0
    %621 = vmatprep.subr.bf16.mxu0 0
    %622 = vmatpush1.bf16.msra.mxu0 0
    %623 = vmatprep.subr.bf16.mxu0 0
    %624 = vmatpush1.bf16.msra.mxu0 0
    %625 = vmatprep.subr.bf16.mxu0 0
    %626 = vmatpush1.bf16.msra.mxu0 0
    %627 = vmatprep.subr.bf16.mxu0 0
    %628 = vmatpush1.bf16.msra.mxu0 0
    %629 = vmatprep.subr.bf16.mxu0 0
    %630 = vmatpush1.bf16.msra.mxu0 0
    %631 = vmatprep.subr.bf16.mxu0 0
    %632 = vmatpush1.bf16.msra.mxu0 0
    %633 = vmatprep.subr.bf16.mxu0 0
    %634 = vmatpush1.bf16.msra.mxu0 0
    %635 = vmatprep.subr.bf16.mxu0 0
    %636 = vmatpush1.bf16.msra.mxu0 0
    %637 = vmatprep.subr.bf16.mxu0 0
    %638 = vmatpush1.bf16.msra.mxu0 0
    %639 = vmatprep.subr.bf16.mxu0 0
    %640 = vmatpush1.bf16.msra.mxu0 0
    %641 = vmatprep.subr.bf16.mxu0 0
    %642 = vmatpush1.bf16.msra.mxu0 0
    %643 = vmatprep.subr.bf16.mxu0 0
    %644 = vmatpush1.bf16.msra.mxu0 0
    %645 = vmatprep.subr.bf16.mxu0 0
    %646 = vmatpush1.bf16.msra.mxu0 0
    %647 = vmatprep.subr.bf16.mxu0 0
    %648 = vmatpush1.bf16.msra.mxu0 0
    %649 = vmatprep.mubr.bf16.mxu0 0
    %650 = vmatmul.mubr.bf16.gmra.mrb[0].mxu0 %v495
    %v651 = vpop.f32.mrb[0].mxu0
    %v652 = vadd.f32 %v612, %v651
    %v653 = vpop.f32.mrb[0].mxu0
    %v654 = vpop.f32.mrb[0].mxu0
    %v655 = vpop.f32.mrb[0].mxu0
    %656 = vdwg.mxu0
    %v657 = vxor.u32 %v652, 2147483648
    %v658 = vmul.f32 %v657, 1.442695
    %v659 = vpow.pop %v658
    %v660 = vadd.f32 %v659, 1.0
    %v661 = vrcp.pop %v660
    %v662 = vmul.f32 1.0, %v661
    %v663 = vld [vmem:[#allocation6] sm:$0xff]
    %v664 = vld [vmem:[#allocation6 + $0x8] sm:$0xff]
    %v665 = vld [vmem:[#allocation6 + $0x10] sm:$0xff]
    %v666 = vld [vmem:[#allocation6 + $0x18] sm:$0xff]
    %v667 = vld [vmem:[#allocation6 + $0x20] sm:$0xff]
    %v668 = vld [vmem:[#allocation6 + $0x28] sm:$0xff]
    %v669 = vld [vmem:[#allocation6 + $0x30] sm:$0xff]
    %v670 = vld [vmem:[#allocation6 + $0x38] sm:$0xff]
    %v671 = vld [vmem:[#allocation6 + $0x40] sm:$0xff]
    %v672 = vld [vmem:[#allocation6 + $0x48] sm:$0xff]
    %v673 = vld [vmem:[#allocation6 + $0x50] sm:$0xff]
    %v674 = vld [vmem:[#allocation6 + $0x58] sm:$0xff]
    %v675 = vld [vmem:[#allocation6 + $0x60] sm:$0xff]
    %v676 = vld [vmem:[#allocation6 + $0x68] sm:$0xff]
    %v677 = vld [vmem:[#allocation6 + $0x70] sm:$0xff]
    %v678 = vld [vmem:[#allocation6 + $0x78] sm:$0xff]
    %v679 = vld [vmem:[%s4] sm:$0x1]
    %v681 = vlaneseq
    %v682 = vshrl.u32 %v681, 7
    %v683 = vsub.s32 0, %v682
    %v684 = vrot.slane %v679, %v683
    %686 = vmatprep.subr.mxu0 0.0
    %687 = vmatpush1.msra.mxu0 %v663
    %688 = vmatprep.subr.mxu0 0.0
    %689 = vmatpush1.msra.mxu0 %v664
    %690 = vmatprep.subr.mxu0 0.0
    %691 = vmatpush1.msra.mxu0 %v665
    %692 = vmatprep.subr.mxu0 0.0
    %693 = vmatpush1.msra.mxu0 %v666
    %694 = vmatprep.subr.mxu0 0.0
    %695 = vmatpush1.msra.mxu0 %v667
    %696 = vmatprep.subr.mxu0 0.0
    %697 = vmatpush1.msra.mxu0 %v668
    %698 = vmatprep.subr.mxu0 0.0
    %699 = vmatpush1.msra.mxu0 %v669
    %700 = vmatprep.subr.mxu0 0.0
    %701 = vmatpush1.msra.mxu0 %v670
    %702 = vmatprep.subr.mxu0 0.0
    %703 = vmatpush1.msra.mxu0 %v671
    %704 = vmatprep.subr.mxu0 0.0
    %705 = vmatpush1.msra.mxu0 %v672
    %706 = vmatprep.subr.mxu0 0.0
    %707 = vmatpush1.msra.mxu0 %v673
    %708 = vmatprep.subr.mxu0 0.0
    %709 = vmatpush1.msra.mxu0 %v674
    %710 = vmatprep.subr.mxu0 0.0
    %711 = vmatpush1.msra.mxu0 %v675
    %712 = vmatprep.subr.mxu0 0.0
    %713 = vmatpush1.msra.mxu0 %v676
    %714 = vmatprep.subr.mxu0 0.0
    %715 = vmatpush1.msra.mxu0 %v677
    %716 = vmatprep.subr.mxu0 0.0
    %717 = vmatpush1.msra.mxu0 %v678
    %718 = vmatprep.subr.mxu0 0.0
    %719 = vmatpush1.msra.mxu0 0.0
    %720 = vmatprep.subr.mxu0 0.0
    %721 = vmatpush1.msra.mxu0 0.0
    %722 = vmatprep.subr.mxu0 0.0
    %723 = vmatpush1.msra.mxu0 0.0
    %724 = vmatprep.subr.mxu0 0.0
    %725 = vmatpush1.msra.mxu0 0.0
    %726 = vmatprep.subr.mxu0 0.0
    %727 = vmatpush1.msra.mxu0 0.0
    %728 = vmatprep.subr.mxu0 0.0
    %729 = vmatpush1.msra.mxu0 0.0
    %730 = vmatprep.subr.mxu0 0.0
    %731 = vmatpush1.msra.mxu0 0.0
    %732 = vmatprep.subr.mxu0 0.0
    %733 = vmatpush1.msra.mxu0 0.0
    %734 = vmatprep.subr.mxu0 0.0
    %735 = vmatpush1.msra.mxu0 0.0
    %736 = vmatprep.subr.mxu0 0.0
    %737 = vmatpush1.msra.mxu0 0.0
    %738 = vmatprep.subr.mxu0 0.0
    %739 = vmatpush1.msra.mxu0 0.0
    %740 = vmatprep.subr.mxu0 0.0
    %741 = vmatpush1.msra.mxu0 0.0
    %742 = vmatprep.subr.mxu0 0.0
    %743 = vmatpush1.msra.mxu0 0.0
    %744 = vmatprep.subr.mxu0 0.0
    %745 = vmatpush1.msra.mxu0 0.0
    %746 = vmatprep.subr.mxu0 0.0
    %747 = vmatpush1.msra.mxu0 0.0
    %748 = vmatprep.subr.mxu0 0.0
    %749 = vmatpush1.msra.mxu0 0.0
    %750 = vmatprep.mubr.f32.mxu0 0.0
    %751 = vmatmul.mubr.f32.gmra.mrb[0].mxu0 %v662
    %v752 = vpop.f32.mrb[0].mxu0
    %v753 = vadd.f32 %v684, %v752
    %v754 = vpop.f32.mrb[0].mxu0
    %755 = vdwg.mxu0
    %v756 = vxor.u32 %v753, 2147483648
    %v757 = vmul.f32 %v756, 1.442695
    %v758 = vpow.pop %v757
    %v759 = vadd.f32 %v758, 1.0
    %v760 = vrcp.pop %v759
    %v761 = vmul.f32 1.0, %v760
    %v762 = vld [vmem:[#allocation7] sm:$0xff]
    %v763 = vld [vmem:[#allocation7 + $0x8] sm:$0xff]
    %v764 = vld [vmem:[#allocation7 + $0x10] sm:$0xff]
    %v765 = vld [vmem:[#allocation7 + $0x18] sm:$0xff]
    %v766 = vld [vmem:[#allocation7 + $0x20] sm:$0xff]
    %v767 = vld [vmem:[#allocation7 + $0x28] sm:$0xff]
    %v768 = vld [vmem:[#allocation7 + $0x30] sm:$0xff]
    %v769 = vld [vmem:[#allocation7 + $0x38] sm:$0xff]
    %v770 = vld [vmem:[#allocation7 + $0x40] sm:$0xff]
    %v771 = vld [vmem:[#allocation7 + $0x48] sm:$0xff]
    %v772 = vld [vmem:[#allocation7 + $0x50] sm:$0xff]
    %v773 = vld [vmem:[#allocation7 + $0x58] sm:$0xff]
    %v774 = vld [vmem:[#allocation7 + $0x60] sm:$0xff]
    %v775 = vld [vmem:[#allocation7 + $0x68] sm:$0xff]
    %v776 = vld [vmem:[#allocation7 + $0x70] sm:$0xff]
    %v777 = vld [vmem:[#allocation7 + $0x78] sm:$0xff]
    %v778 = vld [vmem:[%s6] sm:$0x1]
    %v780 = vlaneseq
    %v781 = vshrl.u32 %v780, 7
    %v782 = vsub.s32 0, %v781
    %v783 = vrot.slane %v778, %v782
    %785 = vmatprep.subr.mxu0 0.0
    %786 = vmatpush1.msra.mxu0 %v762
    %787 = vmatprep.subr.mxu0 0.0
    %788 = vmatpush1.msra.mxu0 %v763
    %789 = vmatprep.subr.mxu0 0.0
    %790 = vmatpush1.msra.mxu0 %v764
    %791 = vmatprep.subr.mxu0 0.0
    %792 = vmatpush1.msra.mxu0 %v765
    %793 = vmatprep.subr.mxu0 0.0
    %794 = vmatpush1.msra.mxu0 %v766
    %795 = vmatprep.subr.mxu0 0.0
    %796 = vmatpush1.msra.mxu0 %v767
    %797 = vmatprep.subr.mxu0 0.0
    %798 = vmatpush1.msra.mxu0 %v768
    %799 = vmatprep.subr.mxu0 0.0
    %800 = vmatpush1.msra.mxu0 %v769
    %801 = vmatprep.subr.mxu0 0.0
    %802 = vmatpush1.msra.mxu0 %v770
    %803 = vmatprep.subr.mxu0 0.0
    %804 = vmatpush1.msra.mxu0 %v771
    %805 = vmatprep.subr.mxu0 0.0
    %806 = vmatpush1.msra.mxu0 %v772
    %807 = vmatprep.subr.mxu0 0.0
    %808 = vmatpush1.msra.mxu0 %v773
    %809 = vmatprep.subr.mxu0 0.0
    %810 = vmatpush1.msra.mxu0 %v774
    %811 = vmatprep.subr.mxu0 0.0
    %812 = vmatpush1.msra.mxu0 %v775
    %813 = vmatprep.subr.mxu0 0.0
    %814 = vmatpush1.msra.mxu0 %v776
    %815 = vmatprep.subr.mxu0 0.0
    %816 = vmatpush1.msra.mxu0 %v777
    %817 = vmatprep.subr.mxu0 0.0
    %818 = vmatpush1.msra.mxu0 0.0
    %819 = vmatprep.subr.mxu0 0.0
    %820 = vmatpush1.msra.mxu0 0.0
    %821 = vmatprep.subr.mxu0 0.0
    %822 = vmatpush1.msra.mxu0 0.0
    %823 = vmatprep.subr.mxu0 0.0
    %824 = vmatpush1.msra.mxu0 0.0
    %825 = vmatprep.subr.mxu0 0.0
    %826 = vmatpush1.msra.mxu0 0.0
    %827 = vmatprep.subr.mxu0 0.0
    %828 = vmatpush1.msra.mxu0 0.0
    %829 = vmatprep.subr.mxu0 0.0
    %830 = vmatpush1.msra.mxu0 0.0
    %831 = vmatprep.subr.mxu0 0.0
    %832 = vmatpush1.msra.mxu0 0.0
    %833 = vmatprep.subr.mxu0 0.0
    %834 = vmatpush1.msra.mxu0 0.0
    %835 = vmatprep.subr.mxu0 0.0
    %836 = vmatpush1.msra.mxu0 0.0
    %837 = vmatprep.subr.mxu0 0.0
    %838 = vmatpush1.msra.mxu0 0.0
    %839 = vmatprep.subr.mxu0 0.0
    %840 = vmatpush1.msra.mxu0 0.0
    %841 = vmatprep.subr.mxu0 0.0
    %842 = vmatpush1.msra.mxu0 0.0
    %843 = vmatprep.subr.mxu0 0.0
    %844 = vmatpush1.msra.mxu0 0.0
    %845 = vmatprep.subr.mxu0 0.0
    %846 = vmatpush1.msra.mxu0 0.0
    %847 = vmatprep.subr.mxu0 0.0
    %848 = vmatpush1.msra.mxu0 0.0
    %849 = vmatprep.mubr.f32.mxu0 0.0
    %850 = vmatmul.mubr.f32.gmra.mrb[0].mxu0 %v761
    %v851 = vpop.f32.mrb[0].mxu0
    %v852 = vadd.f32 %v783, %v851
    %v853 = vpop.f32.mrb[0].mxu0
    %854 = vdwg.mxu0
    %855 = vmax.xlane.f32.xlu0 %v852
    %v856 = vpop.xlane.xlu0 %855
    %v857 = vsub.f32 %v852, %v856
    %v858 = vmul.f32 %v857, 1.442695
    %v859 = vpow.pop %v858
    %860 = vadd.xlane.f32.xlu0 %v859
    %v861 = vpop.xlane.xlu0 %860
    %v862 = vlog2.pop %v861
    %v863 = vmul.f32 %v862, 0.6931472
    %v864 = vsub.f32 %v857, %v863
    %v865 = vpack.c.bf16 %v864, %v864
    %866 = vst [vmem:[%s7] sm:$0xf] %v865
    // Predicated region
    $region46: #{mlp_forward.1} parent=1 // pred_check
      _
    $region47: #{mlp_forward.1} parent=1 // pred_check_branch
      %868 = sbr.rel (0) target = $region49
    $region48: #{mlp_forward.1} parent=1 // pred_region
      _
    $region49: #{mlp_forward.1} parent=1 // pred_fallthru
      _
    // Predicated region
    $region50: #{mlp_forward.1} parent=1 // pred_check
      _
    $region51: #{mlp_forward.1} parent=1 // pred_check_branch
      %870 = sbr.rel (0) target = $region53
    $region52: #{mlp_forward.1} parent=1 // pred_region
      _
    $region53: #{mlp_forward.1} parent=1 // pred_fallthru
      _
    %871 = vsyncpa [#allocation3], 1
    %872 = vsyncpa [#allocation5], 1
    %873 = vsyncpa [#allocation8], 1

</llo_original>
